<compile_context>
chip_gen: v5e
topology: v5e:2x2
jax: 0.10.0
libtpu: 0.0.40
codegen_flags: <defaults>
</compile_context>

<pallas_src>
import functools

import jax
import jax.numpy as jnp
from jax.experimental import pallas as pl
from jax.experimental.pallas import tpu as pltpu


def _round_up(x, m):
    return (x + m - 1) // m * m


def _num_tensorcores():
    """2 for megacore chips (v7x etc.), 1 for single-TC inference chips."""
    try:
        kind = jax.devices()[0].device_kind.lower()
    except Exception:
        return 1
    single_tc = ("v5 lite", "v5e", "v5litepod", "v6 lite", "v6e")
    return 1 if any(s in kind for s in single_tc) else 2


def _grid_plan(batch, num_tc, cap=1024):
    """Return (tile_b, padded_batch).

    Single-TC: one grid step until the batch exceeds the 1024-row cap
    (grid is a serial loop there; splitting only adds per-step overhead).
    2-TC: even split so both TensorCores get identical work.
    """
    b8 = _round_up(max(batch, 8), 8)
    if num_tc >= 2 and b8 >= 16:
        half = _round_up(pl.cdiv(b8, 2), 8)
        tile_b = min(cap, half)
        steps = pl.cdiv(half, tile_b) * 2          # always an even step count
    else:
        tile_b = min(cap, b8)
        steps = pl.cdiv(b8, tile_b)
    return tile_b, steps * tile_b


def _generator_kernel(x_ref,
                      w1_ref, b1_ref,
                      w2_ref, b2_ref,
                      w3_ref, b3_ref,
                      o_ref):
    """Whole 3-layer MLP for one batch tile, fused in VMEM."""
    mxu_dtype = w1_ref.dtype                     # bf16 (default) or f32
    x = x_ref[...].astype(mxu_dtype)

    # Layer 1: Linear(latent_dim, 128) + LeakyReLU(0.2)   (f32 accumulate)
    h1 = jnp.dot(x, w1_ref[...], preferred_element_type=jnp.float32) + b1_ref[...]
    h1 = jnp.maximum(h1, 0.2 * h1)

    # Layer 2: Linear(128, 256) + LeakyReLU(0.2)
    h2 = jnp.dot(h1.astype(mxu_dtype), w2_ref[...],
                 preferred_element_type=jnp.float32) + b2_ref[...]
    h2 = jnp.maximum(h2, 0.2 * h2)

    # Layer 3: Linear(256, latent_dim) + Sigmoid (single EUP tanh, no overflow)
    h3 = jnp.dot(h2.astype(mxu_dtype), w3_ref[...],
                 preferred_element_type=jnp.float32) + b3_ref[...]
    o_ref[...] = (0.5 + 0.5 * jnp.tanh(0.5 * h3)).astype(o_ref.dtype)


def prepare_params(params, compute_dtype=jnp.bfloat16):
    """One-time weight prep: cast MXU operands, keep biases in f32.

    Do this at init, not per forward call (avoids ~6 small XLA kernels per
    call that previously dominated dispatch time at small batch).
    """
    return {
        "w1": params["w1"].astype(compute_dtype),
        "w2": params["w2"].astype(compute_dtype),
        "w3": params["w3"].astype(compute_dtype),
        "b1": params["b1"].astype(jnp.float32),
        "b2": params["b2"].astype(jnp.float32),
        "b3": params["b3"].astype(jnp.float32),
    }


def generator_forward(x, prepped, *, tile_b=None):
    """x: [B, latent_dim].  prepped: output of prepare_params().

    Weights are [in_features, out_features] (transpose of nn.Linear.weight)
    so every layer is `x @ W + b` on the MXU.
    """
    B, latent_dim = x.shape
    w1, b1 = prepped["w1"], prepped["b1"]   # [latent_dim,128], [1,128]
    w2, b2 = prepped["w2"], prepped["b2"]   # [128,256],        [1,256]
    w3, b3 = prepped["w3"], prepped["b3"]   # [256,latent_dim], [1,latent_dim]

    if tile_b is None:
        tile_b, B_pad = _grid_plan(B, _num_tensorcores())
    else:
        B_pad = _round_up(max(B, tile_b), tile_b)

    # Batch-only padding (no lane padding); skipped entirely when B divides.
    if B_pad != B:
        x_in = jnp.zeros((B_pad, latent_dim), x.dtype).at[:B].set(x)
    else:
        x_in = x

    grid = (B_pad // tile_b,)

    def _full_spec(arr):  # weights / biases: same (whole-array) block each step
        return pl.BlockSpec(arr.shape, lambda i: (0, 0))

    out = pl.pallas_call(
        _generator_kernel,
        out_shape=jax.ShapeDtypeStruct((B_pad, latent_dim), x.dtype),
        grid=grid,
        in_specs=[
            pl.BlockSpec((tile_b, latent_dim), lambda i: (i, 0)),   # x tile
            _full_spec(w1), _full_spec(b1),
            _full_spec(w2), _full_spec(b2),
            _full_spec(w3), _full_spec(b3),
        ],
        out_specs=pl.BlockSpec((tile_b, latent_dim), lambda i: (i, 0)),
        compiler_params=pltpu.CompilerParams(
            dimension_semantics=("parallel",)),
    )(x_in, w1, b1, w2, b2, w3, b3)

    return out[:B] if B_pad != B else out


def init_generator_params(key, latent_dim):
    """Deterministic init mimicking nn.Linear default (U(-1/sqrt(fan_in), +))."""
    dims = [(latent_dim, 128), (128, 256), (256, latent_dim)]
    params = {}
    keys = jax.random.split(key, 2 * len(dims))
    for n, (fan_in, fan_out) in enumerate(dims):
        bound = 1.0 / jnp.sqrt(fan_in)
        w = jax.random.uniform(keys[2 * n], (fan_in, fan_out),
                               jnp.float32, -bound, bound)
        b = jax.random.uniform(keys[2 * n + 1], (1, fan_out),
                               jnp.float32, -bound, bound)
        params[f"w{n + 1}"] = w
        params[f"b{n + 1}"] = b
    return params


def _reference_forward(x, p):
    hi = jax.lax.Precision.HIGHEST
    h1 = jnp.dot(x, p["w1"], precision=hi) + p["b1"]
    h1 = jnp.where(h1 > 0, h1, 0.2 * h1)
    h2 = jnp.dot(h1, p["w2"], precision=hi) + p["b2"]
    h2 = jnp.where(h2 > 0, h2, 0.2 * h2)
    h3 = jnp.dot(h2, p["w3"], precision=hi) + p["b3"]
    return jax.nn.sigmoid(h3)


if __name__ == "__main__":
    latent_dim = 32
    batch = 64

    key = jax.random.PRNGKey(0)
    k_x, k_p = jax.random.split(key)
    x = jax.random.normal(k_x, (batch, latent_dim), jnp.float32)
    params = init_generator_params(k_p, latent_dim)

    ref = _reference_forward(x, params)

    fwd = jax.jit(generator_forward)

    # Exact-precision path (f32 operands on the MXU, f32 accumulate, exact sigmoid).
    prepped_f32 = prepare_params(params, compute_dtype=jnp.float32)
    out_f32 = jax.block_until_ready(fwd(x, prepped_f32))
    assert out_f32.shape == (batch, latent_dim)
    assert jnp.allclose(out_f32, ref, atol=5e-3, rtol=5e-3)

    # Reduced-precision path (bf16 into the MXU, f32 accumulate) — the
    # recommended configuration on v6e/v7x; looser tolerance for bf16 rounding.
    prepped_bf16 = prepare_params(params, compute_dtype=jnp.bfloat16)
    out_bf16 = jax.block_until_ready(fwd(x, prepped_bf16))
    assert out_bf16.shape == (batch, latent_dim)
    assert jnp.allclose(out_bf16, ref, atol=3e-2, rtol=3e-2)

    print("KERNEL_OK")
</pallas_src>

<mosaic_0001>
module attributes {stable_mosaic.version = 11 : i64} {
  func.func @_generator_kernel(%arg0: i32, %arg1: memref<32x32xf32, #tpu.memory_space<vmem>>, %arg2: memref<32x128xf32, #tpu.memory_space<vmem>>, %arg3: memref<1x128xf32, #tpu.memory_space<vmem>>, %arg4: memref<128x256xf32, #tpu.memory_space<vmem>>, %arg5: memref<1x256xf32, #tpu.memory_space<vmem>>, %arg6: memref<256x32xf32, #tpu.memory_space<vmem>>, %arg7: memref<1x32xf32, #tpu.memory_space<vmem>>, %arg8: memref<32x32xf32, #tpu.memory_space<vmem>>) attributes {dimension_semantics = [#tpu.dimension_semantics<parallel>], iteration_bounds = array<i64: 2>, scalar_prefetch = 0 : i64, scratch_operands = 0 : i64, tpu.core_type = #tpu.core_type<tc>, window_params = [{transform_indices = @transform_0, window_bounds = array<i64: 32, 32>}, {pipeline_mode = #tpu.pipeline_mode<synchronous>, transform_indices = @transform_1, window_bounds = array<i64: 32, 128>}, {pipeline_mode = #tpu.pipeline_mode<synchronous>, transform_indices = @transform_2, window_bounds = array<i64: 1, 128>}, {pipeline_mode = #tpu.pipeline_mode<synchronous>, transform_indices = @transform_3, window_bounds = array<i64: 128, 256>}, {pipeline_mode = #tpu.pipeline_mode<synchronous>, transform_indices = @transform_4, window_bounds = array<i64: 1, 256>}, {pipeline_mode = #tpu.pipeline_mode<synchronous>, transform_indices = @transform_5, window_bounds = array<i64: 256, 32>}, {pipeline_mode = #tpu.pipeline_mode<synchronous>, transform_indices = @transform_6, window_bounds = array<i64: 1, 32>}, {transform_indices = @transform_7, window_bounds = array<i64: 32, 32>}]} {
    %c0 = arith.constant 0 : index
    %c0_0 = arith.constant 0 : index
    %0 = vector.load %arg1[%c0, %c0_0] : memref<32x32xf32, #tpu.memory_space<vmem>>, vector<32x32xf32>
    %c0_1 = arith.constant 0 : index
    %c0_2 = arith.constant 0 : index
    %1 = vector.load %arg2[%c0_1, %c0_2] : memref<32x128xf32, #tpu.memory_space<vmem>>, vector<32x128xf32>
    %cst = arith.constant dense<0.000000e+00> : vector<32x128xf32>
    %2 = tpu.matmul %0, %1, %cst {dimension_numbers = #tpu.dot_dimension_numbers<[1], [0], [0], [1], [0, 0, 1, 1], [], []>} : vector<32x32xf32>, vector<32x128xf32>, vector<32x128xf32> -> vector<32x128xf32>
    %c0_3 = arith.constant 0 : index
    %c0_4 = arith.constant 0 : index
    %3 = vector.load %arg3[%c0_3, %c0_4] : memref<1x128xf32, #tpu.memory_space<vmem>>, vector<1x128xf32>
    %4 = vector.broadcast %3 : vector<1x128xf32> to vector<32x128xf32>
    %5 = arith.addf %2, %4 : vector<32x128xf32>
    %cst_5 = arith.constant 2.000000e-01 : f32
    %6 = vector.broadcast %cst_5 : f32 to vector<32x128xf32>
    %7 = arith.mulf %6, %5 : vector<32x128xf32>
    %8 = arith.maximumf %5, %7 : vector<32x128xf32>
    %c0_6 = arith.constant 0 : index
    %c0_7 = arith.constant 0 : index
    %9 = vector.load %arg4[%c0_6, %c0_7] : memref<128x256xf32, #tpu.memory_space<vmem>>, vector<128x256xf32>
    %cst_8 = arith.constant dense<0.000000e+00> : vector<32x256xf32>
    %10 = tpu.matmul %8, %9, %cst_8 {dimension_numbers = #tpu.dot_dimension_numbers<[1], [0], [0], [1], [0, 0, 1, 1], [], []>} : vector<32x128xf32>, vector<128x256xf32>, vector<32x256xf32> -> vector<32x256xf32>
    %c0_9 = arith.constant 0 : index
    %c0_10 = arith.constant 0 : index
    %11 = vector.load %arg5[%c0_9, %c0_10] : memref<1x256xf32, #tpu.memory_space<vmem>>, vector<1x256xf32>
    %12 = vector.broadcast %11 : vector<1x256xf32> to vector<32x256xf32>
    %13 = arith.addf %10, %12 : vector<32x256xf32>
    %cst_11 = arith.constant 2.000000e-01 : f32
    %14 = vector.broadcast %cst_11 : f32 to vector<32x256xf32>
    %15 = arith.mulf %14, %13 : vector<32x256xf32>
    %16 = arith.maximumf %13, %15 : vector<32x256xf32>
    %c0_12 = arith.constant 0 : index
    %c0_13 = arith.constant 0 : index
    %17 = vector.load %arg6[%c0_12, %c0_13] : memref<256x32xf32, #tpu.memory_space<vmem>>, vector<256x32xf32>
    %cst_14 = arith.constant dense<0.000000e+00> : vector<32x32xf32>
    %18 = tpu.matmul %16, %17, %cst_14 {dimension_numbers = #tpu.dot_dimension_numbers<[1], [0], [0], [1], [0, 0, 1, 1], [], []>} : vector<32x256xf32>, vector<256x32xf32>, vector<32x32xf32> -> vector<32x32xf32>
    %c0_15 = arith.constant 0 : index
    %c0_16 = arith.constant 0 : index
    %19 = vector.load %arg7[%c0_15, %c0_16] : memref<1x32xf32, #tpu.memory_space<vmem>>, vector<1x32xf32>
    %20 = vector.broadcast %19 : vector<1x32xf32> to vector<32x32xf32>
    %21 = arith.addf %18, %20 : vector<32x32xf32>
    %cst_17 = arith.constant 5.000000e-01 : f32
    %22 = vector.broadcast %cst_17 : f32 to vector<32x32xf32>
    %23 = arith.mulf %22, %21 : vector<32x32xf32>
    %24 = math.tanh %23 : vector<32x32xf32>
    %cst_18 = arith.constant 5.000000e-01 : f32
    %25 = vector.broadcast %cst_18 : f32 to vector<32x32xf32>
    %26 = arith.mulf %25, %24 : vector<32x32xf32>
    %cst_19 = arith.constant 5.000000e-01 : f32
    %27 = vector.broadcast %cst_19 : f32 to vector<32x32xf32>
    %28 = arith.addf %27, %26 : vector<32x32xf32>
    %c0_20 = arith.constant 0 : index
    %c0_21 = arith.constant 0 : index
    %29 = vector.load %arg8[%c0_20, %c0_21] : memref<32x32xf32, #tpu.memory_space<vmem>>, vector<32x32xf32>
    tpu.vector_store %arg8[%c0_20, %c0_21], %28 {strides = array<i32>} : memref<32x32xf32, #tpu.memory_space<vmem>>, vector<32x32xf32>,
    return
  }
  func.func @transform_0(%arg0: i32) -> (i32, i32) {
    %c0_i32 = arith.constant 0 : i32
    %c0_i32_0 = arith.constant 0 : i32
    return %arg0, %c0_i32 : i32, i32
  }
  func.func @transform_1(%arg0: i32) -> (i32, i32) {
    %c0_i32 = arith.constant 0 : i32
    %c0_i32_0 = arith.constant 0 : i32
    %c0_i32_1 = arith.constant 0 : i32
    return %c0_i32, %c0_i32_0 : i32, i32
  }
  func.func @transform_2(%arg0: i32) -> (i32, i32) {
    %c0_i32 = arith.constant 0 : i32
    %c0_i32_0 = arith.constant 0 : i32
    %c0_i32_1 = arith.constant 0 : i32
    return %c0_i32, %c0_i32_0 : i32, i32
  }
  func.func @transform_3(%arg0: i32) -> (i32, i32) {
    %c0_i32 = arith.constant 0 : i32
    %c0_i32_0 = arith.constant 0 : i32
    %c0_i32_1 = arith.constant 0 : i32
    return %c0_i32, %c0_i32_0 : i32, i32
  }
  func.func @transform_4(%arg0: i32) -> (i32, i32) {
    %c0_i32 = arith.constant 0 : i32
    %c0_i32_0 = arith.constant 0 : i32
    %c0_i32_1 = arith.constant 0 : i32
    return %c0_i32, %c0_i32_0 : i32, i32
  }
  func.func @transform_5(%arg0: i32) -> (i32, i32) {
    %c0_i32 = arith.constant 0 : i32
    %c0_i32_0 = arith.constant 0 : i32
    %c0_i32_1 = arith.constant 0 : i32
    return %c0_i32, %c0_i32_0 : i32, i32
  }
  func.func @transform_6(%arg0: i32) -> (i32, i32) {
    %c0_i32 = arith.constant 0 : i32
    %c0_i32_0 = arith.constant 0 : i32
    %c0_i32_1 = arith.constant 0 : i32
    return %c0_i32, %c0_i32_0 : i32, i32
  }
  func.func @transform_7(%arg0: i32) -> (i32, i32) {
    %c0_i32 = arith.constant 0 : i32
    %c0_i32_0 = arith.constant 0 : i32
    return %arg0, %c0_i32 : i32, i32
  }
}

</mosaic_0001>

<llo_original>
// kernel: generator_forward.1
$region0: #{generator_forward.1}
  #allocation0 [shape = 'u32[]', space=smem, size = 0x4, offset = 0x4, fixed_abs, tag = 'smem constant byte address 0x4 - core index']
  #allocation1 [shape = 'u32[72,128]{1,0:T(1,128)}', space=vmem, size = 0x9000, scoped, tag = 'internal scratch']
  %s0 = inlined_call_operand.vmem [shape: f32[64,32], index: 0, kind: input, shape index: {}]
  %s1 = inlined_call_operand.vmem [shape: f32[32,128], index: 1, kind: input, shape index: {}]
  %s2 = inlined_call_operand.vmem [shape: f32[1,128], index: 2, kind: input, shape index: {}]
  %s3 = inlined_call_operand.vmem [shape: f32[128,256], index: 3, kind: input, shape index: {}]
  %s4 = inlined_call_operand.vmem [shape: f32[1,256], index: 4, kind: input, shape index: {}]
  %s5 = inlined_call_operand.vmem [shape: f32[256,32], index: 5, kind: input, shape index: {}]
  %s6 = inlined_call_operand.vmem [shape: f32[1,32], index: 6, kind: input, shape index: {}]
  %s7 = inlined_call_operand.vmem [shape: f32[64,32], index: 7, kind: output, shape index: {}]
  %s8 = sld [smem:[#allocation0]]
  $region61: #{generator_forward.1} parent=0
    _
  %s10 = ssub.s32 1, %s8
  %s11 = scalar_select 0, %s10, %s8
  loop: start=0, step=1, limit=4
  $region2: #{generator_forward.1} parent=0 // loop_pre_header
    _
  $region3: #{generator_forward.1} parent=0 // loop_header
    %s13 = sphi 0, %s17
    %p14 = scmp.ge.s32.totalorder %s13, 4
    %s23 = sphi 0, %s25
    %s26 = sphi 0, %s23
    %s27 = sphi 0, %s26
    %s43 = sphi 0, %s27
    %s47 = sphi 0, %s47
    %s49 = sphi 0, %s47
    %s50 = sphi 0, %s49
    %s64 = sphi 0, %s50
    %s68 = sphi 0, %s68
    %s70 = sphi 0, %s68
    %s71 = sphi 0, %s70
    %s85 = sphi 0, %s71
    %s89 = sphi 0, %s89
    %s91 = sphi 0, %s89
    %s92 = sphi 0, %s91
    %s106 = sphi 0, %s92
    %s110 = sphi 0, %s110
    %s112 = sphi 0, %s110
    %s113 = sphi 0, %s112
    %s127 = sphi 0, %s113
    %s131 = sphi 0, %s131
    %s133 = sphi 0, %s131
    %s134 = sphi 0, %s133
    %s148 = sphi 0, %s134
    %s152 = sphi 0, %s152
    %s154 = sphi 0, %s152
    %s155 = sphi 0, %s154
    %s169 = sphi 0, %s155
    %s175 = sphi 0, %s177
    %s178 = sphi 0, %s175
    %s179 = sphi 0, %s178
    %s195 = sphi 0, %s179
  $region4: #{generator_forward.1} parent=0 // loop_header_branch
    %16 = sbr.rel (%p14) target = $region8
  $region5: #{generator_forward.1} parent=0 // loop_body
    %s18 = ssub.s32 %s13, 1
    %s19 = ssub.s32 %s13, 2
    %s20 = sadd.s32 %s13, 1
    %s21 = ssub.s32 %s13, %s20
    %p22 = scmp.eq.s32.totalorder %s21, 0
    %s24 = sadd.s32 %s23, 1
    %s25 = scalar_select %p22, %s23, %s24
    %p28 = pneg %p22
    %p29 = scmp.eq.s32.totalorder %s13, 1
    %p30 = por %p28, %p29
    %p31 = scmp.ne.s32.totalorder %s23, %s26
    %p32 = scmp.eq.s32.totalorder %s13, 0
    %p33 = por %p31, %p32
    %p34 = scmp.ne.s32.totalorder %s23, %s26
    %p35 = scmp.eq.s32.totalorder %s18, 1
    %p36 = por %p34, %p35
    %p37 = scmp.ne.s32.totalorder %s26, %s27
    %p38 = scmp.eq.s32.totalorder %s18, 0
    %p39 = por %p37, %p38
    %p40 = scmp.ne.s32.totalorder %s26, %s27
    %p41 = scmp.eq.s32.totalorder %s19, 1
    %p42 = por %p40, %p41
    %p44 = scmp.ne.s32.totalorder %s27, %s43
    %p45 = scmp.eq.s32.totalorder %s19, 0
    %p46 = por %p44, %p45
    %s48 = sadd.s32 %s47, 1
    %p51 = scmp.eq.s32.totalorder %s13, 1
    %p52 = scmp.ne.s32.totalorder %s47, %s49
    %p53 = scmp.eq.s32.totalorder %s13, 0
    %p54 = por %p52, %p53
    %p55 = scmp.ne.s32.totalorder %s47, %s49
    %p56 = scmp.eq.s32.totalorder %s18, 1
    %p57 = por %p55, %p56
    %p58 = scmp.ne.s32.totalorder %s49, %s50
    %p59 = scmp.eq.s32.totalorder %s18, 0
    %p60 = por %p58, %p59
    %p61 = scmp.ne.s32.totalorder %s49, %s50
    %p62 = scmp.eq.s32.totalorder %s19, 1
    %p63 = por %p61, %p62
    %p65 = scmp.ne.s32.totalorder %s50, %s64
    %p66 = scmp.eq.s32.totalorder %s19, 0
    %p67 = por %p65, %p66
    %s69 = sadd.s32 %s68, 1
    %p72 = scmp.eq.s32.totalorder %s13, 1
    %p73 = scmp.ne.s32.totalorder %s68, %s70
    %p74 = scmp.eq.s32.totalorder %s13, 0
    %p75 = por %p73, %p74
    %p76 = scmp.ne.s32.totalorder %s68, %s70
    %p77 = scmp.eq.s32.totalorder %s18, 1
    %p78 = por %p76, %p77
    %p79 = scmp.ne.s32.totalorder %s70, %s71
    %p80 = scmp.eq.s32.totalorder %s18, 0
    %p81 = por %p79, %p80
    %p82 = scmp.ne.s32.totalorder %s70, %s71
    %p83 = scmp.eq.s32.totalorder %s19, 1
    %p84 = por %p82, %p83
    %p86 = scmp.ne.s32.totalorder %s71, %s85
    %p87 = scmp.eq.s32.totalorder %s19, 0
    %p88 = por %p86, %p87
    %s90 = sadd.s32 %s89, 1
    %p93 = scmp.eq.s32.totalorder %s13, 1
    %p94 = scmp.ne.s32.totalorder %s89, %s91
    %p95 = scmp.eq.s32.totalorder %s13, 0
    %p96 = por %p94, %p95
    %p97 = scmp.ne.s32.totalorder %s89, %s91
    %p98 = scmp.eq.s32.totalorder %s18, 1
    %p99 = por %p97, %p98
    %p100 = scmp.ne.s32.totalorder %s91, %s92
    %p101 = scmp.eq.s32.totalorder %s18, 0
    %p102 = por %p100, %p101
    %p103 = scmp.ne.s32.totalorder %s91, %s92
    %p104 = scmp.eq.s32.totalorder %s19, 1
    %p105 = por %p103, %p104
    %p107 = scmp.ne.s32.totalorder %s92, %s106
    %p108 = scmp.eq.s32.totalorder %s19, 0
    %p109 = por %p107, %p108
    %s111 = sadd.s32 %s110, 1
    %p114 = scmp.eq.s32.totalorder %s13, 1
    %p115 = scmp.ne.s32.totalorder %s110, %s112
    %p116 = scmp.eq.s32.totalorder %s13, 0
    %p117 = por %p115, %p116
    %p118 = scmp.ne.s32.totalorder %s110, %s112
    %p119 = scmp.eq.s32.totalorder %s18, 1
    %p120 = por %p118, %p119
    %p121 = scmp.ne.s32.totalorder %s112, %s113
    %p122 = scmp.eq.s32.totalorder %s18, 0
    %p123 = por %p121, %p122
    %p124 = scmp.ne.s32.totalorder %s112, %s113
    %p125 = scmp.eq.s32.totalorder %s19, 1
    %p126 = por %p124, %p125
    %p128 = scmp.ne.s32.totalorder %s113, %s127
    %p129 = scmp.eq.s32.totalorder %s19, 0
    %p130 = por %p128, %p129
    %s132 = sadd.s32 %s131, 1
    %p135 = scmp.eq.s32.totalorder %s13, 1
    %p136 = scmp.ne.s32.totalorder %s131, %s133
    %p137 = scmp.eq.s32.totalorder %s13, 0
    %p138 = por %p136, %p137
    %p139 = scmp.ne.s32.totalorder %s131, %s133
    %p140 = scmp.eq.s32.totalorder %s18, 1
    %p141 = por %p139, %p140
    %p142 = scmp.ne.s32.totalorder %s133, %s134
    %p143 = scmp.eq.s32.totalorder %s18, 0
    %p144 = por %p142, %p143
    %p145 = scmp.ne.s32.totalorder %s133, %s134
    %p146 = scmp.eq.s32.totalorder %s19, 1
    %p147 = por %p145, %p146
    %p149 = scmp.ne.s32.totalorder %s134, %s148
    %p150 = scmp.eq.s32.totalorder %s19, 0
    %p151 = por %p149, %p150
    %s153 = sadd.s32 %s152, 1
    %p156 = scmp.eq.s32.totalorder %s13, 1
    %p157 = scmp.ne.s32.totalorder %s152, %s154
    %p158 = scmp.eq.s32.totalorder %s13, 0
    %p159 = por %p157, %p158
    %p160 = scmp.ne.s32.totalorder %s152, %s154
    %p161 = scmp.eq.s32.totalorder %s18, 1
    %p162 = por %p160, %p161
    %p163 = scmp.ne.s32.totalorder %s154, %s155
    %p164 = scmp.eq.s32.totalorder %s18, 0
    %p165 = por %p163, %p164
    %p166 = scmp.ne.s32.totalorder %s154, %s155
    %p167 = scmp.eq.s32.totalorder %s19, 1
    %p168 = por %p166, %p167
    %p170 = scmp.ne.s32.totalorder %s155, %s169
    %p171 = scmp.eq.s32.totalorder %s19, 0
    %p172 = por %p170, %p171
    %s173 = ssub.s32 %s13, %s20
    %p174 = scmp.eq.s32.totalorder %s173, 0
    %s176 = sadd.s32 %s175, 1
    %s177 = scalar_select %p174, %s175, %s176
    %p180 = pneg %p174
    %p181 = scmp.eq.s32.totalorder %s13, 1
    %p182 = por %p180, %p181
    %p183 = scmp.ne.s32.totalorder %s175, %s178
    %p184 = scmp.eq.s32.totalorder %s13, 0
    %p185 = por %p183, %p184
    %p186 = scmp.ne.s32.totalorder %s175, %s178
    %p187 = scmp.eq.s32.totalorder %s18, 1
    %p188 = por %p186, %p187
    %p189 = scmp.ne.s32.totalorder %s178, %s179
    %p190 = scmp.eq.s32.totalorder %s18, 0
    %p191 = por %p189, %p190
    %p192 = scmp.ne.s32.totalorder %s178, %s179
    %p193 = scmp.eq.s32.totalorder %s19, 1
    %p194 = por %p192, %p193
    %p196 = scmp.ne.s32.totalorder %s179, %s195
    %p197 = scmp.eq.s32.totalorder %s19, 0
    %p198 = por %p196, %p197
    %p199 = scmp.le.s32.totalorder 1, %s13
    %p200 = scmp.lt.s32.totalorder %s13, 3
    %p201 = pnand %p199, %p200
    %p202 = pneg %p201
    // Predicated region
    $region9: #{generator_forward.1} parent=5 // pred_check
      _
    $region10: #{generator_forward.1} parent=5 // pred_check_branch
      %204 = sbr.rel (%p201) target = $region12
    $region11: #{generator_forward.1} parent=5 // pred_region
      %s205 = ssub.s32 %s13, 1
      // Predicated region
      $region13: #{generator_forward.1} parent=11 // pred_check
        %p206 = pneg %p60
      $region14: #{generator_forward.1} parent=11 // pred_check_branch
        %208 = sbr.rel (%p206) target = $region16
      $region15: #{generator_forward.1} parent=11 // pred_region
        _
      $region16: #{generator_forward.1} parent=11 // pred_fallthru
        _
      // Predicated region
      $region17: #{generator_forward.1} parent=11 // pred_check
        %p209 = pneg %p81
      $region18: #{generator_forward.1} parent=11 // pred_check_branch
        %211 = sbr.rel (%p209) target = $region20
      $region19: #{generator_forward.1} parent=11 // pred_region
        _
      $region20: #{generator_forward.1} parent=11 // pred_fallthru
        _
      // Predicated region
      $region21: #{generator_forward.1} parent=11 // pred_check
        %p212 = pneg %p102
      $region22: #{generator_forward.1} parent=11 // pred_check_branch
        %214 = sbr.rel (%p212) target = $region24
      $region23: #{generator_forward.1} parent=11 // pred_region
        _
      $region24: #{generator_forward.1} parent=11 // pred_fallthru
        _
      // Predicated region
      $region25: #{generator_forward.1} parent=11 // pred_check
        %p215 = pneg %p123
      $region26: #{generator_forward.1} parent=11 // pred_check_branch
        %217 = sbr.rel (%p215) target = $region28
      $region27: #{generator_forward.1} parent=11 // pred_region
        _
      $region28: #{generator_forward.1} parent=11 // pred_fallthru
        _
      // Predicated region
      $region29: #{generator_forward.1} parent=11 // pred_check
        %p218 = pneg %p144
      $region30: #{generator_forward.1} parent=11 // pred_check_branch
        %220 = sbr.rel (%p218) target = $region32
      $region31: #{generator_forward.1} parent=11 // pred_region
        _
      $region32: #{generator_forward.1} parent=11 // pred_fallthru
        _
      // Predicated region
      $region33: #{generator_forward.1} parent=11 // pred_check
        %p221 = pneg %p165
      $region34: #{generator_forward.1} parent=11 // pred_check_branch
        %223 = sbr.rel (%p221) target = $region36
      $region35: #{generator_forward.1} parent=11 // pred_region
        _
      $region36: #{generator_forward.1} parent=11 // pred_fallthru
        _
    $region12: #{generator_forward.1} parent=5 // pred_fallthru
      _
    %p224 = scmp.lt.s32.totalorder %s13, 2
    // Predicated region
    $region37: #{generator_forward.1} parent=5 // pred_check
      %p225 = pneg %p224
    $region38: #{generator_forward.1} parent=5 // pred_check_branch
      %227 = sbr.rel (%p225) target = $region40
    $region39: #{generator_forward.1} parent=5 // pred_region
      // Predicated region
      $region41: #{generator_forward.1} parent=39 // pred_check
        %p228 = pneg %p33
      $region42: #{generator_forward.1} parent=39 // pred_check_branch
        %230 = sbr.rel (%p228) target = $region44
      $region43: #{generator_forward.1} parent=39 // pred_region
        %s231 = smul.u32 4, %s13
        %p232 = scmp.lt.s32.totalorder %s231, 7
        %s233 = scalar_select %p232, %s231, 7
        %s234 = smul.addr %s233, 8
        %s235 = scalar_lea.vmem %s0, %s234
        %s236 = smul.u32 4, %s13
      $region44: #{generator_forward.1} parent=39 // pred_fallthru
        _
    $region40: #{generator_forward.1} parent=5 // pred_fallthru
      _
    %p237 = scmp.le.s32.totalorder 1, %s13
    %p238 = scmp.lt.s32.totalorder %s13, 3
    %p239 = pnand %p237, %p238
    %p240 = pneg %p239
    // Predicated region
    $region45: #{generator_forward.1} parent=5 // pred_check
      _
    $region46: #{generator_forward.1} parent=5 // pred_check_branch
      %242 = sbr.rel (%p239) target = $region48
    $region47: #{generator_forward.1} parent=5 // pred_region
      %s243 = ssub.s32 %s13, 1
      %s244 = smul.u32 4, %s18
      %p245 = scmp.lt.s32.totalorder %s244, 7
      %s246 = scalar_select %p245, %s244, 7
      %s247 = smul.addr %s246, 8
      %s248 = scalar_lea.vmem %s0, %s247
      %p249 = pneg %p39
      %p250 = pneg %p36
      %p251 = pneg %p60
      %p252 = pneg %p57
      %p253 = pneg %p81
      %p254 = pneg %p78
      %p255 = pneg %p102
      %p256 = pneg %p99
      %p257 = pneg %p123
      %p258 = pneg %p120
      %p259 = pneg %p144
      %p260 = pneg %p141
      %p261 = pneg %p165
      %p262 = pneg %p162
      %p263 = pneg %p191
      %p264 = pneg %p188
      %s265 = smul.u32 4, %s18
      %p266 = scmp.lt.s32.totalorder %s265, 7
      %s267 = scalar_select %p266, %s265, 7
      %s268 = smul.addr %s267, 8
      %s269 = scalar_lea.vmem %s7, %s268
      %s270 = smul.u32 4, %s18
      %p271 = scmp.lt.s32.totalorder %s270, 7
      %s272 = scalar_select %p271, %s270, 7
      %s273 = smul.addr %s272, 8
      %s274 = scalar_lea.vmem %s0, %s273
      %s275 = smul.u32 4, %s18
      %s276 = smul.u32 4, %s18
      %p277 = scmp.lt.s32.totalorder %s276, 7
      %s278 = scalar_select %p277, %s276, 7
      %s279 = smul.addr %s278, 8
      %s280 = scalar_lea.vmem %s7, %s279
      %s281 = smul.u32 4, %s18
      %v282 = vld [vmem:[%s274] sm:$0xff]
      %v283 = vld [vmem:[%s274 + $0x8] sm:$0xff]
      %v284 = vld [vmem:[%s274 + $0x10] sm:$0xff]
      %v285 = vld [vmem:[%s274 + $0x18] sm:$0xff]
      %v286 = vld [vmem:[%s1] sm:$0xff]
      %v287 = vld [vmem:[%s1 + $0x8] sm:$0xff]
      %v288 = vld [vmem:[%s1 + $0x10] sm:$0xff]
      %v289 = vld [vmem:[%s1 + $0x18] sm:$0xff]
      %v290 = vld [vmem:[%s2] sm:$0x1]
      %v292 = vperm.slane %v290, 0
      %vm294 = vcmask 261120
      %v296 = vsel %vm294, %v282, 0
      %v299 = vsel %vm294, %v283, 0
      %v302 = vsel %vm294, %v284, 0
      %v305 = vsel %vm294, %v285, 0
      %307 = vmatpush.msra.mxu0 0.0
      %308 = vmatpush.msra.mxu0 0.0
      %309 = vmatpush.msra.mxu0 0.0
      %310 = vmatpush.msra.mxu0 0.0
      %311 = vmatpush.msra.mxu0 0.0
      %312 = vmatpush.msra.mxu0 0.0
      %313 = vmatpush.msra.mxu0 0.0
      %314 = vmatpush.msra.mxu0 0.0
      %315 = vmatpush.msra.mxu0 0.0
      %316 = vmatpush.msra.mxu0 0.0
      %317 = vmatpush.msra.mxu0 0.0
      %318 = vmatpush.msra.mxu0 0.0
      %319 = vmatpush.msra.mxu0 %v289
      %320 = vmatpush.msra.mxu0 %v288
      %321 = vmatpush.msra.mxu0 %v287
      %322 = vmatpush.msra.mxu0 %v286
      %323 = vmatmul.f32.gmra.mxu0 %v296
      %v324 = vpop.f32.mrf.mxu0
      %v325 = vadd.f32 %v292, %v324
      %326 = vmatmul.f32.gmra.mxu0 %v299
      %v327 = vpop.f32.mrf.mxu0
      %v328 = vadd.f32 %v292, %v327
      %329 = vmatmul.f32.gmra.mxu0 %v302
      %v330 = vpop.f32.mrf.mxu0
      %v331 = vadd.f32 %v292, %v330
      %332 = vmatmul.f32.gmra.mxu0 %v305
      %v333 = vpop.f32.mrf.mxu0
      %v334 = vadd.f32 %v292, %v333
      %335 = vdwg.mxu0
      %v336 = vmul.f32 %v325, 0.2
      %v337 = vmul.f32 %v328, 0.2
      %v338 = vmul.f32 %v331, 0.2
      %v339 = vmul.f32 %v334, 0.2
      %v340 = vmax.f32 %v325, %v336
      %v341 = vmax.f32 %v328, %v337
      %v342 = vmax.f32 %v331, %v338
      %v343 = vmax.f32 %v334, %v339
      %v344 = vld [vmem:[%s3] sm:$0xff]
      %v345 = vld [vmem:[%s3 + $0x8] sm:$0xff]
      %v346 = vld [vmem:[%s3 + $0x10] sm:$0xff]
      %v347 = vld [vmem:[%s3 + $0x18] sm:$0xff]
      %v348 = vld [vmem:[%s3 + $0x20] sm:$0xff]
      %v349 = vld [vmem:[%s3 + $0x28] sm:$0xff]
      %v350 = vld [vmem:[%s3 + $0x30] sm:$0xff]
      %v351 = vld [vmem:[%s3 + $0x38] sm:$0xff]
      %v352 = vld [vmem:[%s3 + $0x40] sm:$0xff]
      %v353 = vld [vmem:[%s3 + $0x48] sm:$0xff]
      %v354 = vld [vmem:[%s3 + $0x50] sm:$0xff]
      %v355 = vld [vmem:[%s3 + $0x58] sm:$0xff]
      %v356 = vld [vmem:[%s3 + $0x60] sm:$0xff]
      %v357 = vld [vmem:[%s3 + $0x68] sm:$0xff]
      %v358 = vld [vmem:[%s3 + $0x70] sm:$0xff]
      %v359 = vld [vmem:[%s3 + $0x78] sm:$0xff]
      %v360 = vld [vmem:[%s3 + $0x80] sm:$0xff]
      %v361 = vld [vmem:[%s3 + $0x88] sm:$0xff]
      %v362 = vld [vmem:[%s3 + $0x90] sm:$0xff]
      %v363 = vld [vmem:[%s3 + $0x98] sm:$0xff]
      %v364 = vld [vmem:[%s3 + $0xa0] sm:$0xff]
      %v365 = vld [vmem:[%s3 + $0xa8] sm:$0xff]
      %v366 = vld [vmem:[%s3 + $0xb0] sm:$0xff]
      %v367 = vld [vmem:[%s3 + $0xb8] sm:$0xff]
      %v368 = vld [vmem:[%s3 + $0xc0] sm:$0xff]
      %v369 = vld [vmem:[%s3 + $0xc8] sm:$0xff]
      %v370 = vld [vmem:[%s3 + $0xd0] sm:$0xff]
      %v371 = vld [vmem:[%s3 + $0xd8] sm:$0xff]
      %v372 = vld [vmem:[%s3 + $0xe0] sm:$0xff]
      %v373 = vld [vmem:[%s3 + $0xe8] sm:$0xff]
      %v374 = vld [vmem:[%s3 + $0xf0] sm:$0xff]
      %v375 = vld [vmem:[%s3 + $0xf8] sm:$0xff]
      %v376 = vld [vmem:[%s4] sm:$0x3]
      %v378 = vperm.slane %v376, 0
      %v379 = vperm.slane %v376, 1
      %382 = vmatpush.msra.mxu0 %v374
      %383 = vmatpush.msra.mxu0 %v372
      %384 = vmatpush.msra.mxu0 %v370
      %385 = vmatpush.msra.mxu0 %v368
      %386 = vmatpush.msra.mxu0 %v366
      %387 = vmatpush.msra.mxu0 %v364
      %388 = vmatpush.msra.mxu0 %v362
      %389 = vmatpush.msra.mxu0 %v360
      %390 = vmatpush.msra.mxu0 %v358
      %391 = vmatpush.msra.mxu0 %v356
      %392 = vmatpush.msra.mxu0 %v354
      %393 = vmatpush.msra.mxu0 %v352
      %394 = vmatpush.msra.mxu0 %v350
      %395 = vmatpush.msra.mxu0 %v348
      %396 = vmatpush.msra.mxu0 %v346
      %397 = vmatpush.msra.mxu0 %v344
      %398 = vmatmul.f32.gmra.mxu0 %v340
      %v399 = vpop.f32.mrf.mxu0
      %v400 = vadd.f32 %v378, %v399
      %401 = vmatmul.f32.gmra.mxu0 %v341
      %v402 = vpop.f32.mrf.mxu0
      %v403 = vadd.f32 %v378, %v402
      %404 = vmatmul.f32.gmra.mxu0 %v342
      %v405 = vpop.f32.mrf.mxu0
      %v406 = vadd.f32 %v378, %v405
      %407 = vmatmul.f32.gmra.mxu0 %v343
      %v408 = vpop.f32.mrf.mxu0
      %v409 = vadd.f32 %v378, %v408
      %410 = vdwg.mxu0
      %411 = vmatpush.msra.mxu0 %v375
      %412 = vmatpush.msra.mxu0 %v373
      %413 = vmatpush.msra.mxu0 %v371
      %414 = vmatpush.msra.mxu0 %v369
      %415 = vmatpush.msra.mxu0 %v367
      %416 = vmatpush.msra.mxu0 %v365
      %417 = vmatpush.msra.mxu0 %v363
      %418 = vmatpush.msra.mxu0 %v361
      %419 = vmatpush.msra.mxu0 %v359
      %420 = vmatpush.msra.mxu0 %v357
      %421 = vmatpush.msra.mxu0 %v355
      %422 = vmatpush.msra.mxu0 %v353
      %423 = vmatpush.msra.mxu0 %v351
      %424 = vmatpush.msra.mxu0 %v349
      %425 = vmatpush.msra.mxu0 %v347
      %426 = vmatpush.msra.mxu0 %v345
      %427 = vmatmul.f32.gmra.mxu0 %v340
      %v428 = vpop.f32.mrf.mxu0
      %v429 = vadd.f32 %v379, %v428
      %430 = vmatmul.f32.gmra.mxu0 %v341
      %v431 = vpop.f32.mrf.mxu0
      %v432 = vadd.f32 %v379, %v431
      %433 = vmatmul.f32.gmra.mxu0 %v342
      %v434 = vpop.f32.mrf.mxu0
      %v435 = vadd.f32 %v379, %v434
      %436 = vmatmul.f32.gmra.mxu0 %v343
      %v437 = vpop.f32.mrf.mxu0
      %v438 = vadd.f32 %v379, %v437
      %439 = vdwg.mxu0
      %v440 = vmul.f32 %v400, 0.2
      %v441 = vmul.f32 %v429, 0.2
      %v442 = vmul.f32 %v403, 0.2
      %v443 = vmul.f32 %v432, 0.2
      %v444 = vmul.f32 %v406, 0.2
      %v445 = vmul.f32 %v435, 0.2
      %v446 = vmul.f32 %v409, 0.2
      %v447 = vmul.f32 %v438, 0.2
      %v448 = vmax.f32 %v400, %v440
      %v449 = vmax.f32 %v429, %v441
      %v450 = vmax.f32 %v403, %v442
      %v451 = vmax.f32 %v432, %v443
      %v452 = vmax.f32 %v406, %v444
      %v453 = vmax.f32 %v435, %v445
      %v454 = vmax.f32 %v409, %v446
      %v455 = vmax.f32 %v438, %v447
      %v456 = vld [vmem:[%s5] sm:$0xff]
      %v457 = vld [vmem:[%s5 + $0x8] sm:$0xff]
      %v458 = vld [vmem:[%s5 + $0x10] sm:$0xff]
      %v459 = vld [vmem:[%s5 + $0x18] sm:$0xff]
      %v460 = vld [vmem:[%s5 + $0x20] sm:$0xff]
      %v461 = vld [vmem:[%s5 + $0x28] sm:$0xff]
      %v462 = vld [vmem:[%s5 + $0x30] sm:$0xff]
      %v463 = vld [vmem:[%s5 + $0x38] sm:$0xff]
      %v464 = vld [vmem:[%s5 + $0x40] sm:$0xff]
      %v465 = vld [vmem:[%s5 + $0x48] sm:$0xff]
      %v466 = vld [vmem:[%s5 + $0x50] sm:$0xff]
      %v467 = vld [vmem:[%s5 + $0x58] sm:$0xff]
      %v468 = vld [vmem:[%s5 + $0x60] sm:$0xff]
      %v469 = vld [vmem:[%s5 + $0x68] sm:$0xff]
      %v470 = vld [vmem:[%s5 + $0x70] sm:$0xff]
      %v471 = vld [vmem:[%s5 + $0x78] sm:$0xff]
      %v472 = vld [vmem:[%s5 + $0x80] sm:$0xff]
      %v473 = vld [vmem:[%s5 + $0x88] sm:$0xff]
      %v474 = vld [vmem:[%s5 + $0x90] sm:$0xff]
      %v475 = vld [vmem:[%s5 + $0x98] sm:$0xff]
      %v476 = vld [vmem:[%s5 + $0xa0] sm:$0xff]
      %v477 = vld [vmem:[%s5 + $0xa8] sm:$0xff]
      %v478 = vld [vmem:[%s5 + $0xb0] sm:$0xff]
      %v479 = vld [vmem:[%s5 + $0xb8] sm:$0xff]
      %v480 = vld [vmem:[%s5 + $0xc0] sm:$0xff]
      %v481 = vld [vmem:[%s5 + $0xc8] sm:$0xff]
      %v482 = vld [vmem:[%s5 + $0xd0] sm:$0xff]
      %v483 = vld [vmem:[%s5 + $0xd8] sm:$0xff]
      %v484 = vld [vmem:[%s5 + $0xe0] sm:$0xff]
      %v485 = vld [vmem:[%s5 + $0xe8] sm:$0xff]
      %v486 = vld [vmem:[%s5 + $0xf0] sm:$0xff]
      %v487 = vld [vmem:[%s5 + $0xf8] sm:$0xff]
      %v488 = vld [vmem:[%s6] sm:$0x1]
      %v490 = vperm.slane %v488, 0
      %492 = vmatpush.msra.mxu0 %v471
      %493 = vmatpush.msra.mxu0 %v470
      %494 = vmatpush.msra.mxu0 %v469
      %495 = vmatpush.msra.mxu0 %v468
      %496 = vmatpush.msra.mxu0 %v467
      %497 = vmatpush.msra.mxu0 %v466
      %498 = vmatpush.msra.mxu0 %v465
      %499 = vmatpush.msra.mxu0 %v464
      %500 = vmatpush.msra.mxu0 %v463
      %501 = vmatpush.msra.mxu0 %v462
      %502 = vmatpush.msra.mxu0 %v461
      %503 = vmatpush.msra.mxu0 %v460
      %504 = vmatpush.msra.mxu0 %v459
      %505 = vmatpush.msra.mxu0 %v458
      %506 = vmatpush.msra.mxu0 %v457
      %507 = vmatpush.msra.mxu0 %v456
      %508 = vmatmul.f32.gmra.mxu0 %v448
      %v509 = vpop.f32.mrf.mxu0
      %v510 = vadd.f32 %v490, %v509
      %511 = vmatmul.f32.gmra.mxu0 %v450
      %v512 = vpop.f32.mrf.mxu0
      %v513 = vadd.f32 %v490, %v512
      %514 = vmatmul.f32.gmra.mxu0 %v452
      %v515 = vpop.f32.mrf.mxu0
      %v516 = vadd.f32 %v490, %v515
      %517 = vmatmul.f32.gmra.mxu0 %v454
      %v518 = vpop.f32.mrf.mxu0
      %v519 = vadd.f32 %v490, %v518
      %520 = vdwg.mxu0
      %521 = vmatpush.msra.mxu0 %v487
      %522 = vmatpush.msra.mxu0 %v486
      %523 = vmatpush.msra.mxu0 %v485
      %524 = vmatpush.msra.mxu0 %v484
      %525 = vmatpush.msra.mxu0 %v483
      %526 = vmatpush.msra.mxu0 %v482
      %527 = vmatpush.msra.mxu0 %v481
      %528 = vmatpush.msra.mxu0 %v480
      %529 = vmatpush.msra.mxu0 %v479
      %530 = vmatpush.msra.mxu0 %v478
      %531 = vmatpush.msra.mxu0 %v477
      %532 = vmatpush.msra.mxu0 %v476
      %533 = vmatpush.msra.mxu0 %v475
      %534 = vmatpush.msra.mxu0 %v474
      %535 = vmatpush.msra.mxu0 %v473
      %536 = vmatpush.msra.mxu0 %v472
      %537 = vmatmul.f32.gmra.mxu0 %v449
      %v538 = vpop.f32.mrf.mxu0
      %v539 = vadd.f32 %v510, %v538
      %540 = vmatmul.f32.gmra.mxu0 %v451
      %v541 = vpop.f32.mrf.mxu0
      %v542 = vadd.f32 %v513, %v541
      %543 = vmatmul.f32.gmra.mxu0 %v453
      %v544 = vpop.f32.mrf.mxu0
      %v545 = vadd.f32 %v516, %v544
      %546 = vmatmul.f32.gmra.mxu0 %v455
      %v547 = vpop.f32.mrf.mxu0
      %v548 = vadd.f32 %v519, %v547
      %549 = vdwg.mxu0
      %v550 = vmul.f32 %v539, 0.5
      %v551 = vmul.f32 %v542, 0.5
      %v552 = vmul.f32 %v545, 0.5
      %v553 = vmul.f32 %v548, 0.5
      %v554 = vtanh.pop %v550
      %v555 = vtanh.pop %v551
      %v556 = vtanh.pop %v552
      %v557 = vtanh.pop %v553
      %v558 = vmul.f32 %v554, 0.5
      %v559 = vmul.f32 %v555, 0.5
      %v560 = vmul.f32 %v556, 0.5
      %v561 = vmul.f32 %v557, 0.5
      %v562 = vadd.f32 %v558, 0.5
      %v563 = vadd.f32 %v559, 0.5
      %v564 = vadd.f32 %v560, 0.5
      %v565 = vadd.f32 %v561, 0.5
      %566 = vst.msk [vmem:[%s280] sm:$0xff] %vm294, %v562
      %567 = vst.msk [vmem:[%s280 + $0x8] sm:$0xff] %vm294, %v563
      %568 = vst.msk [vmem:[%s280 + $0x10] sm:$0xff] %vm294, %v564
      %569 = vst.msk [vmem:[%s280 + $0x18] sm:$0xff] %vm294, %v565
      %s570 = smul.u32 4, %s18
      %p571 = scmp.lt.s32.totalorder %s570, 7
      %s572 = scalar_select %p571, %s570, 7
      %s573 = smul.addr %s572, 8
      %s574 = scalar_lea.vmem %s7, %s573
      // Predicated region
      $region49: #{generator_forward.1} parent=47 // pred_check
        %p575 = pneg %p188
      $region50: #{generator_forward.1} parent=47 // pred_check_branch
        %577 = sbr.rel (%p575) target = $region52
      $region51: #{generator_forward.1} parent=47 // pred_region
        %s578 = smul.u32 4, %s18
      $region52: #{generator_forward.1} parent=47 // pred_fallthru
        _
    $region48: #{generator_forward.1} parent=5 // pred_fallthru
      _
    %p579 = scmp.le.s32.totalorder 2, %s13
    // Predicated region
    $region53: #{generator_forward.1} parent=5 // pred_check
      %p580 = pneg %p579
    $region54: #{generator_forward.1} parent=5 // pred_check_branch
      %582 = sbr.rel (%p580) target = $region56
    $region55: #{generator_forward.1} parent=5 // pred_region
      %s583 = ssub.s32 %s13, 2
      // Predicated region
      $region57: #{generator_forward.1} parent=55 // pred_check
        %p584 = pneg %p194
      $region58: #{generator_forward.1} parent=55 // pred_check_branch
        %586 = sbr.rel (%p584) target = $region60
      $region59: #{generator_forward.1} parent=55 // pred_region
        %s587 = smul.u32 4, %s19
        %p588 = scmp.lt.s32.totalorder %s587, 7
        %s589 = scalar_select %p588, %s587, 7
        %s590 = smul.addr %s589, 8
        %s591 = scalar_lea.vmem %s7, %s590
      $region60: #{generator_forward.1} parent=55 // pred_fallthru
        _
    $region56: #{generator_forward.1} parent=5 // pred_fallthru
      _
  $region6: #{generator_forward.1} parent=0 // loop_footer
    %s17 = sadd.s32 1, %s13
  $region7: #{generator_forward.1} parent=0 // loop_footer_branch
    %12 = sbr.rel target = $region3
  $region8: #{generator_forward.1} parent=0 // loop_exit
    _

</llo_original>
